<compile_context>
chip_gen: v7x
topology: tpu7x:2x2x1
jax: 0.10.0
libtpu: 0.0.40
codegen_flags: <defaults>
</compile_context>

<pallas_src>
import jax
import jax.numpy as jnp
from jax import lax
from jax.experimental import pallas as pl
from jax.experimental.pallas import tpu as pltpu


def _round_up(x, m):
    return ((x + m - 1) // m) * m


def _device_kind():
    try:
        return jax.devices()[0].device_kind.lower()
    except Exception:
        return ""


def _make_fusion_kernel(n_views, batch, batch_tile):
    """Kernel body; refs = (x_0, ..., x_{n-1}, out), each ref is a (tb, D) tile.

    Invariant (relied upon by the ragged-tail handling): every output row is a
    function of its own input row only -- no cross-row statistics.
    """
    ragged = (batch % batch_tile) != 0

    def kernel(*refs):
        in_refs = refs[:n_views]
        o_ref = refs[n_views]

        views = [r[...] for r in in_refs]  # native-dtype (tb, D) tiles

        # Per-view row max (exact in any dtype); only tiny (tb, 1) f32 vectors
        # carry the softmax math (VPU/EUP work, negligible vs. HBM traffic).
        t = [jnp.max(v, axis=-1, keepdims=True).astype(jnp.float32)
             for v in views]

        if n_views == 1:
            acc = views[0].astype(jnp.float32)
        elif n_views == 2:
            # Exact 2-way softmax: softmax([t0, t1]) = [sigmoid(t0-t1), 1-..]
            w0 = 1.0 / (1.0 + jnp.exp(t[1] - t[0]))
            acc = w0 * views[0] + (1.0 - w0) * views[1]
        else:
            m = t[0]
            for i in range(1, n_views):
                m = jnp.maximum(m, t[i])
            e = [jnp.exp(ti - m) for ti in t]
            denom = e[0]
            for i in range(1, n_views):
                denom = denom + e[i]
            inv = 1.0 / denom                      # exact; (tb,1) only
            acc = (e[0] * inv) * views[0]
            for i in range(1, n_views):
                acc = acc + (e[i] * inv) * views[i]

        if ragged:
            # Zero the out-of-bounds tail rows of the last tile (their writes
            # are discarded anyway; this just keeps them deterministic).
            row = (pl.program_id(0) * batch_tile
                   + lax.broadcasted_iota(jnp.int32, (acc.shape[0], 1), 0))
            acc = jnp.where(row < batch, acc, 0.0)

        o_ref[...] = acc.astype(o_ref.dtype)

    return kernel


def _choose_tiling(B, n_views, D, in_itemsize, out_itemsize, device_kind):
    """Pick (batch_tile, vmem_limit_bytes), generation-aware."""
    if "v6" in device_kind or "trillium" in device_kind:
        budget, min_steps = 24 << 20, 2   # 32 MiB scoped default, 128 MiB phys
    elif "v7" in device_kind:
        budget, min_steps = 20 << 20, 4   # 64 MiB physical, 2 TensorCores
    elif "v5" in device_kind:
        budget, min_steps = 12 << 20, 2   # 16 MiB scoped default
    else:
        budget, min_steps = 12 << 20, 2   # conservative fallback

    # double-buffered inputs + double-buffered output + f32 accumulator/temps
    per_row = (2 * n_views * D * in_itemsize
               + 2 * D * out_itemsize
               + 2 * D * 4)
    tb = max(8, ((budget // max(per_row, 1)) // 8) * 8)

    vmem_limit = min(32 << 20, max(16 << 20, budget + (6 << 20)))

    if B <= 8:
        return B, vmem_limit              # one tiny full-batch tile
    tb = min(tb, (B // 8) * 8)            # never let the block exceed the batch

    steps = pl.cdiv(B, tb)
    # Split further only when the extra ~0.35us/step overhead is paid back by
    # pipelining (v5e/v6e) or megacore sharding (v7x, large batches only).
    if steps > 1 or ("v7" in device_kind and B >= 512):
        steps = max(steps, min_steps)
        if "v7" in device_kind and (steps % 2):
            steps += 1                    # even count: neither TC idles at tail
        tb = min(tb, max(8, _round_up(pl.cdiv(B, steps), 8)))
        tb = min(tb, (B // 8) * 8)
    return tb, vmem_limit


def protein_fusion_attention(features, *, batch_tile=None, out_dtype=None):
    """features: list of N arrays, each (B, D). Returns (B, D)."""
    features = list(features)
    n_views = len(features)
    assert n_views >= 1
    B, D = features[0].shape
    for f in features:
        assert f.shape == (B, D), "all feature views must share shape (B, D)"
    in_dtype = jnp.dtype(features[0].dtype)
    out_dtype = jnp.dtype(out_dtype or in_dtype)

    # Perf note: D should be a multiple of 128 (lane width) so the output
    # stores are unmasked; pad feature_dim at model-definition time otherwise.

    kind = _device_kind()
    auto_tb, vmem_limit = _choose_tiling(
        B, n_views, D, in_dtype.itemsize, out_dtype.itemsize, kind)
    if batch_tile is None:
        tb = auto_tb
    else:
        tb = int(batch_tile)
        assert tb % 8 == 0 or tb == B, "batch_tile must be 8-aligned (or == B)"
    # Keep the block within the array's batch dim; the cdiv grid + in-kernel
    # mask handle the ragged tail without any host-side padding copy.
    tb = B if B <= 8 else min(tb, (B // 8) * 8)

    grid = (pl.cdiv(B, tb),)

    cost = pl.CostEstimate(
        flops=3 * n_views * B * D,
        transcendentals=n_views * B,
        bytes_accessed=(n_views * in_dtype.itemsize + out_dtype.itemsize) * B * D,
    )

    return pl.pallas_call(
        _make_fusion_kernel(n_views, B, tb),
        out_shape=jax.ShapeDtypeStruct((B, D), out_dtype),
        grid_spec=pltpu.PrefetchScalarGridSpec(
            num_scalar_prefetch=0,
            grid=grid,
            in_specs=[pl.BlockSpec((tb, D), lambda b: (b, 0))
                      for _ in range(n_views)],
            out_specs=pl.BlockSpec((tb, D), lambda b: (b, 0)),
        ),
        compiler_params=pltpu.CompilerParams(
            dimension_semantics=("parallel",),
            vmem_limit_bytes=vmem_limit,
        ),
        cost_estimate=cost,
    )(*features)


def _reference(features):
    x = jnp.stack(features, axis=1).astype(jnp.float32)
    t = jnp.max(x, axis=-1)
    a = jax.nn.softmax(t, axis=1)
    return jnp.sum(a[:, :, None] * x, axis=1)


if __name__ == "__main__":
    # In DRHGTModel, ProteinFusionAttention fuses N=2 views (drug-side and
    # disease-side protein messages), each (num_proteins, feature_dim).
    B, N, D = 64, 2, 256
    keys = jax.random.split(jax.random.PRNGKey(0), N)
    feats = [jax.random.normal(k, (B, D), dtype=jnp.float32) for k in keys]
    out = jax.block_until_ready(protein_fusion_attention(feats))
    ref = _reference(feats)
    assert out.shape == (B, D)
    assert jnp.allclose(out, ref, atol=1e-4, rtol=1e-4), "mismatch vs reference"

    # Ragged batch (B % tile != 0): exercises the no-pad cdiv grid + tail mask.
    B2 = 50
    keys2 = jax.random.split(jax.random.PRNGKey(1), N)
    feats2 = [jax.random.normal(k, (B2, D), dtype=jnp.float32) for k in keys2]
    out2 = jax.block_until_ready(protein_fusion_attention(feats2, batch_tile=16))
    ref2 = _reference(feats2)
    assert out2.shape == (B2, D)
    assert jnp.allclose(out2, ref2, atol=1e-4, rtol=1e-4), "mismatch (ragged)"

    # General N > 2 softmax path.
    N3, B3 = 4, 40
    keys3 = jax.random.split(jax.random.PRNGKey(2), N3)
    feats3 = [jax.random.normal(k, (B3, D), dtype=jnp.float32) for k in keys3]
    out3 = jax.block_until_ready(protein_fusion_attention(feats3))
    ref3 = _reference(feats3)
    assert out3.shape == (B3, D)
    assert jnp.allclose(out3, ref3, atol=1e-4, rtol=1e-4), "mismatch (N=4)"

    print("KERNEL_OK")
</pallas_src>

<mosaic_0001>
module attributes {stable_mosaic.version = 11 : i64} {
  func.func @kernel(%arg0: i32, %arg1: memref<64x256xf32, #tpu.memory_space<vmem>>, %arg2: memref<64x256xf32, #tpu.memory_space<vmem>>, %arg3: memref<64x256xf32, #tpu.memory_space<vmem>>) attributes {dimension_semantics = [#tpu.dimension_semantics<parallel>], iteration_bounds = array<i64: 1>, scalar_prefetch = 0 : i64, scratch_operands = 0 : i64, tpu.core_type = #tpu.core_type<tc>, window_params = [{transform_indices = @transform_0, window_bounds = array<i64: 64, 256>}, {transform_indices = @transform_1, window_bounds = array<i64: 64, 256>}, {transform_indices = @transform_2, window_bounds = array<i64: 64, 256>}]} {
    %c0 = arith.constant 0 : index
    %c0_0 = arith.constant 0 : index
    %0 = vector.load %arg1[%c0, %c0_0] : memref<64x256xf32, #tpu.memory_space<vmem>>, vector<64x256xf32>
    %c0_1 = arith.constant 0 : index
    %c0_2 = arith.constant 0 : index
    %1 = vector.load %arg2[%c0_1, %c0_2] : memref<64x256xf32, #tpu.memory_space<vmem>>, vector<64x256xf32>
    %cst = arith.constant dense<0xFF800000> : vector<64xf32>
    %2 = vector.multi_reduction <maximumf>, %0, %cst [1] : vector<64x256xf32> to vector<64xf32>
    %3 = vector.shape_cast %2 : vector<64xf32> to vector<64x1xf32>
    %cst_3 = arith.constant dense<0xFF800000> : vector<64xf32>
    %4 = vector.multi_reduction <maximumf>, %1, %cst_3 [1] : vector<64x256xf32> to vector<64xf32>
    %5 = vector.shape_cast %4 : vector<64xf32> to vector<64x1xf32>
    %6 = arith.subf %5, %3 : vector<64x1xf32>
    %7 = math.exp %6 : vector<64x1xf32>
    %cst_4 = arith.constant 1.000000e+00 : f32
    %8 = vector.broadcast %cst_4 : f32 to vector<64x1xf32>
    %9 = arith.addf %8, %7 : vector<64x1xf32>
    %cst_5 = arith.constant 1.000000e+00 : f32
    %10 = vector.broadcast %cst_5 : f32 to vector<64x1xf32>
    %11 = arith.divf %10, %9 : vector<64x1xf32>
    %12 = vector.broadcast %11 : vector<64x1xf32> to vector<64x256xf32>
    %13 = arith.mulf %12, %0 : vector<64x256xf32>
    %cst_6 = arith.constant 1.000000e+00 : f32
    %14 = vector.broadcast %cst_6 : f32 to vector<64x1xf32>
    %15 = arith.subf %14, %11 : vector<64x1xf32>
    %16 = vector.broadcast %15 : vector<64x1xf32> to vector<64x256xf32>
    %17 = arith.mulf %16, %1 : vector<64x256xf32>
    %18 = arith.addf %13, %17 : vector<64x256xf32>
    %c0_7 = arith.constant 0 : index
    %c0_8 = arith.constant 0 : index
    %19 = vector.load %arg3[%c0_7, %c0_8] : memref<64x256xf32, #tpu.memory_space<vmem>>, vector<64x256xf32>
    tpu.vector_store %arg3[%c0_7, %c0_8], %18 {strides = array<i32>} : memref<64x256xf32, #tpu.memory_space<vmem>>, vector<64x256xf32>,
    return
  }
  func.func @transform_0(%arg0: i32) -> (i32, i32) {
    %c0_i32 = arith.constant 0 : i32
    %c0_i32_0 = arith.constant 0 : i32
    return %arg0, %c0_i32 : i32, i32
  }
  func.func @transform_1(%arg0: i32) -> (i32, i32) {
    %c0_i32 = arith.constant 0 : i32
    %c0_i32_0 = arith.constant 0 : i32
    return %arg0, %c0_i32 : i32, i32
  }
  func.func @transform_2(%arg0: i32) -> (i32, i32) {
    %c0_i32 = arith.constant 0 : i32
    %c0_i32_0 = arith.constant 0 : i32
    return %arg0, %c0_i32 : i32, i32
  }
}

</mosaic_0001>

<llo_original>
// kernel: tpu_custom_call.1
$region0: #{tpu_custom_call.1}
  #allocation0 [shape = 'u32[]', space=smem, size = 0x4, offset = 0x4, fixed_abs, tag = 'smem constant byte address 0x4 - core index']
  #allocation1 [shape = 'u32[144,128]{1,0:T(1,128)}', space=vmem, size = 0x12000, scoped, tag = 'internal scratch']
  %s0 = inlined_call_operand.hbm [shape: f32[64,256], index: 0, kind: input, shape index: {}]
  %s1 = inlined_call_operand.hbm [shape: f32[64,256], index: 1, kind: input, shape index: {}]
  %s2 = inlined_call_operand.hbm [shape: f32[64,256], index: 2, kind: output, shape index: {}]
  %s3 = sld [smem:[#allocation0]]
  $region26: #{tpu_custom_call.1} parent=0
    _
  %s5 = ssub.s32 1, %s3
  %s6 = scalar_select 0, %s5, %s3
  $region1: #{tpu_custom_call.1} parent=0
    #allocation2 [shape = 'u8[65536]{0}', space=vmem, size = 0x10000, scoped, tag = 'input window, operand 0, single buffered']
    #allocation3 [shape = 's32[1]{0}', space=sflag, size = 0x4, scoped, tag = 'scoped memory for tpu_custom_call.1']
    #allocation4 [shape = 's32[1]{0}', space=sflag, size = 0x4, scoped, tag = 'scoped memory for tpu_custom_call.1']
    #allocation5 [shape = 'u8[65536]{0}', space=vmem, size = 0x10000, scoped, tag = 'input window, operand 1, single buffered']
    #allocation6 [shape = 's32[1]{0}', space=sflag, size = 0x4, scoped, tag = 'scoped memory for tpu_custom_call.1']
    #allocation7 [shape = 'u8[65536]{0}', space=vmem, size = 0x10000, scoped, tag = 'output window, operand 0, single buffered']
    %7 = vsyncpa [#allocation3], 0
    %8 = vsyncpa [#allocation6], 0
    %9 = vsyncpa [#allocation4], 0
    // Predicated region
    $region2: #{tpu_custom_call.1} parent=1 // pred_check
      _
    $region3: #{tpu_custom_call.1} parent=1 // pred_check_branch
      %11 = sbr.rel (0) target = $region5
    $region4: #{tpu_custom_call.1} parent=1 // pred_region
      %s13 = ssub.s32 2048, 2048
      %14 = vsyncadd [#allocation3], %s13
      %s15 = sshll.u32 [#allocation2], 4
      %s16 = int_to_ptr.vmem [resolvable:$true] %s15
      %21 = dma.hbm_to_vmem [thread:$0]  %s0, 2048, %s16, [#allocation3], 256, 256, 16
    $region5: #{tpu_custom_call.1} parent=1 // pred_fallthru
      _
    // Predicated region
    $region6: #{tpu_custom_call.1} parent=1 // pred_check
      _
    $region7: #{tpu_custom_call.1} parent=1 // pred_check_branch
      %23 = sbr.rel (0) target = $region9
    $region8: #{tpu_custom_call.1} parent=1 // pred_region
      %s25 = ssub.s32 2048, 2048
      %26 = vsyncadd [#allocation6], %s25
      %s27 = sshll.u32 [#allocation5], 4
      %s28 = int_to_ptr.vmem [resolvable:$true] %s27
      %33 = dma.hbm_to_vmem [thread:$0]  %s1, 2048, %s28, [#allocation6], 256, 256, 16
    $region9: #{tpu_custom_call.1} parent=1 // pred_fallthru
      _
    // Predicated region
    $region10: #{tpu_custom_call.1} parent=1 // pred_check
      _
    $region11: #{tpu_custom_call.1} parent=1 // pred_check_branch
      %35 = sbr.rel (0) target = $region13
    $region12: #{tpu_custom_call.1} parent=1 // pred_region
      %36 = dma.done [#allocation3], 2048
    $region13: #{tpu_custom_call.1} parent=1 // pred_fallthru
      _
    // Predicated region
    $region14: #{tpu_custom_call.1} parent=1 // pred_check
      _
    $region15: #{tpu_custom_call.1} parent=1 // pred_check_branch
      %38 = sbr.rel (0) target = $region17
    $region16: #{tpu_custom_call.1} parent=1 // pred_region
      %39 = dma.done [#allocation6], 2048
    $region17: #{tpu_custom_call.1} parent=1 // pred_fallthru
      _
    %v40 = vld [vmem:[#allocation2] sm:$0xff]
    %v41 = vld [vmem:[#allocation2 + $0x8] sm:$0xff]
    %v42 = vld [vmem:[#allocation2 + $0x10] sm:$0xff]
    %v43 = vld [vmem:[#allocation2 + $0x18] sm:$0xff]
    %v44 = vld [vmem:[#allocation2 + $0x20] sm:$0xff]
    %v45 = vld [vmem:[#allocation2 + $0x28] sm:$0xff]
    %v46 = vld [vmem:[#allocation2 + $0x30] sm:$0xff]
    %v47 = vld [vmem:[#allocation2 + $0x38] sm:$0xff]
    %v48 = vld [vmem:[#allocation2 + $0x40] sm:$0xff]
    %v49 = vld [vmem:[#allocation2 + $0x48] sm:$0xff]
    %v50 = vld [vmem:[#allocation2 + $0x50] sm:$0xff]
    %v51 = vld [vmem:[#allocation2 + $0x58] sm:$0xff]
    %v52 = vld [vmem:[#allocation2 + $0x60] sm:$0xff]
    %v53 = vld [vmem:[#allocation2 + $0x68] sm:$0xff]
    %v54 = vld [vmem:[#allocation2 + $0x70] sm:$0xff]
    %v55 = vld [vmem:[#allocation2 + $0x78] sm:$0xff]
    %v56 = vld [vmem:[#allocation5] sm:$0xff]
    %v57 = vld [vmem:[#allocation5 + $0x8] sm:$0xff]
    %v58 = vld [vmem:[#allocation5 + $0x10] sm:$0xff]
    %v59 = vld [vmem:[#allocation5 + $0x18] sm:$0xff]
    %v60 = vld [vmem:[#allocation5 + $0x20] sm:$0xff]
    %v61 = vld [vmem:[#allocation5 + $0x28] sm:$0xff]
    %v62 = vld [vmem:[#allocation5 + $0x30] sm:$0xff]
    %v63 = vld [vmem:[#allocation5 + $0x38] sm:$0xff]
    %v64 = vld [vmem:[#allocation5 + $0x40] sm:$0xff]
    %v65 = vld [vmem:[#allocation5 + $0x48] sm:$0xff]
    %v66 = vld [vmem:[#allocation5 + $0x50] sm:$0xff]
    %v67 = vld [vmem:[#allocation5 + $0x58] sm:$0xff]
    %v68 = vld [vmem:[#allocation5 + $0x60] sm:$0xff]
    %v69 = vld [vmem:[#allocation5 + $0x68] sm:$0xff]
    %v70 = vld [vmem:[#allocation5 + $0x70] sm:$0xff]
    %v71 = vld [vmem:[#allocation5 + $0x78] sm:$0xff]
    %v72 = vmax.f32 %v40, %v41
    %73 = vmax.xlane.f32.xlu0 %v72
    %v74 = vpop.xlane.xlu0 %73
    %v75 = vmax.f32 %v42, %v43
    %76 = vmax.xlane.f32.xlu0 %v75
    %v77 = vpop.xlane.xlu0 %76
    %v78 = vmax.f32 %v44, %v45
    %79 = vmax.xlane.f32.xlu0 %v78
    %v80 = vpop.xlane.xlu0 %79
    %v81 = vmax.f32 %v46, %v47
    %82 = vmax.xlane.f32.xlu0 %v81
    %v83 = vpop.xlane.xlu0 %82
    %v84 = vmax.f32 %v48, %v49
    %85 = vmax.xlane.f32.xlu0 %v84
    %v86 = vpop.xlane.xlu0 %85
    %v87 = vmax.f32 %v50, %v51
    %88 = vmax.xlane.f32.xlu0 %v87
    %v89 = vpop.xlane.xlu0 %88
    %v90 = vmax.f32 %v52, %v53
    %91 = vmax.xlane.f32.xlu0 %v90
    %v92 = vpop.xlane.xlu0 %91
    %v93 = vmax.f32 %v54, %v55
    %94 = vmax.xlane.f32.xlu0 %v93
    %v95 = vpop.xlane.xlu0 %94
    %v96 = vmax.f32 %v56, %v57
    %97 = vmax.xlane.f32.xlu0 %v96
    %v98 = vpop.xlane.xlu0 %97
    %v99 = vmax.f32 %v58, %v59
    %100 = vmax.xlane.f32.xlu0 %v99
    %v101 = vpop.xlane.xlu0 %100
    %v102 = vmax.f32 %v60, %v61
    %103 = vmax.xlane.f32.xlu0 %v102
    %v104 = vpop.xlane.xlu0 %103
    %v105 = vmax.f32 %v62, %v63
    %106 = vmax.xlane.f32.xlu0 %v105
    %v107 = vpop.xlane.xlu0 %106
    %v108 = vmax.f32 %v64, %v65
    %109 = vmax.xlane.f32.xlu0 %v108
    %v110 = vpop.xlane.xlu0 %109
    %v111 = vmax.f32 %v66, %v67
    %112 = vmax.xlane.f32.xlu0 %v111
    %v113 = vpop.xlane.xlu0 %112
    %v114 = vmax.f32 %v68, %v69
    %115 = vmax.xlane.f32.xlu0 %v114
    %v116 = vpop.xlane.xlu0 %115
    %v117 = vmax.f32 %v70, %v71
    %118 = vmax.xlane.f32.xlu0 %v117
    %v119 = vpop.xlane.xlu0 %118
    %v120 = vsub.f32 %v98, %v74
    %v121 = vsub.f32 %v101, %v77
    %v122 = vsub.f32 %v104, %v80
    %v123 = vsub.f32 %v107, %v83
    %v124 = vsub.f32 %v110, %v86
    %v125 = vsub.f32 %v113, %v89
    %v126 = vsub.f32 %v116, %v92
    %v127 = vsub.f32 %v119, %v95
    %v128 = vmul.f32 %v120, 1.442695
    %v129 = vpow.pop %v128
    %v130 = vmul.f32 %v121, 1.442695
    %v131 = vpow.pop %v130
    %v132 = vmul.f32 %v122, 1.442695
    %v133 = vpow.pop %v132
    %v134 = vmul.f32 %v123, 1.442695
    %v135 = vpow.pop %v134
    %v136 = vmul.f32 %v124, 1.442695
    %v137 = vpow.pop %v136
    %v138 = vmul.f32 %v125, 1.442695
    %v139 = vpow.pop %v138
    %v140 = vmul.f32 %v126, 1.442695
    %v141 = vpow.pop %v140
    %v142 = vmul.f32 %v127, 1.442695
    %v143 = vpow.pop %v142
    %v144 = vadd.f32 %v129, 1.0
    %v145 = vadd.f32 %v131, 1.0
    %v146 = vadd.f32 %v133, 1.0
    %v147 = vadd.f32 %v135, 1.0
    %v148 = vadd.f32 %v137, 1.0
    %v149 = vadd.f32 %v139, 1.0
    %v150 = vadd.f32 %v141, 1.0
    %v151 = vadd.f32 %v143, 1.0
    %v152 = vrcp.pop %v144
    %v153 = vmul.f32 1.0, %v152
    %v154 = vrcp.pop %v145
    %v155 = vmul.f32 1.0, %v154
    %v156 = vrcp.pop %v146
    %v157 = vmul.f32 1.0, %v156
    %v158 = vrcp.pop %v147
    %v159 = vmul.f32 1.0, %v158
    %v160 = vrcp.pop %v148
    %v161 = vmul.f32 1.0, %v160
    %v162 = vrcp.pop %v149
    %v163 = vmul.f32 1.0, %v162
    %v164 = vrcp.pop %v150
    %v165 = vmul.f32 1.0, %v164
    %v166 = vrcp.pop %v151
    %v167 = vmul.f32 1.0, %v166
    %v168 = vmul.f32 %v153, %v40
    %v169 = vmul.f32 %v153, %v41
    %v170 = vmul.f32 %v155, %v42
    %v171 = vmul.f32 %v155, %v43
    %v172 = vmul.f32 %v157, %v44
    %v173 = vmul.f32 %v157, %v45
    %v174 = vmul.f32 %v159, %v46
    %v175 = vmul.f32 %v159, %v47
    %v176 = vmul.f32 %v161, %v48
    %v177 = vmul.f32 %v161, %v49
    %v178 = vmul.f32 %v163, %v50
    %v179 = vmul.f32 %v163, %v51
    %v180 = vmul.f32 %v165, %v52
    %v181 = vmul.f32 %v165, %v53
    %v182 = vmul.f32 %v167, %v54
    %v183 = vmul.f32 %v167, %v55
    %v184 = vsub.f32 1.0, %v153
    %v185 = vsub.f32 1.0, %v155
    %v186 = vsub.f32 1.0, %v157
    %v187 = vsub.f32 1.0, %v159
    %v188 = vsub.f32 1.0, %v161
    %v189 = vsub.f32 1.0, %v163
    %v190 = vsub.f32 1.0, %v165
    %v191 = vsub.f32 1.0, %v167
    %v192 = vmul.f32 %v184, %v56
    %v193 = vmul.f32 %v184, %v57
    %v194 = vmul.f32 %v185, %v58
    %v195 = vmul.f32 %v185, %v59
    %v196 = vmul.f32 %v186, %v60
    %v197 = vmul.f32 %v186, %v61
    %v198 = vmul.f32 %v187, %v62
    %v199 = vmul.f32 %v187, %v63
    %v200 = vmul.f32 %v188, %v64
    %v201 = vmul.f32 %v188, %v65
    %v202 = vmul.f32 %v189, %v66
    %v203 = vmul.f32 %v189, %v67
    %v204 = vmul.f32 %v190, %v68
    %v205 = vmul.f32 %v190, %v69
    %v206 = vmul.f32 %v191, %v70
    %v207 = vmul.f32 %v191, %v71
    %v208 = vadd.f32 %v168, %v192
    %v209 = vadd.f32 %v169, %v193
    %v210 = vadd.f32 %v170, %v194
    %v211 = vadd.f32 %v171, %v195
    %v212 = vadd.f32 %v172, %v196
    %v213 = vadd.f32 %v173, %v197
    %v214 = vadd.f32 %v174, %v198
    %v215 = vadd.f32 %v175, %v199
    %v216 = vadd.f32 %v176, %v200
    %v217 = vadd.f32 %v177, %v201
    %v218 = vadd.f32 %v178, %v202
    %v219 = vadd.f32 %v179, %v203
    %v220 = vadd.f32 %v180, %v204
    %v221 = vadd.f32 %v181, %v205
    %v222 = vadd.f32 %v182, %v206
    %v223 = vadd.f32 %v183, %v207
    %224 = vst [vmem:[#allocation7] sm:$0xff] %v208
    %225 = vst [vmem:[#allocation7 + $0x8] sm:$0xff] %v209
    %226 = vst [vmem:[#allocation7 + $0x10] sm:$0xff] %v210
    %227 = vst [vmem:[#allocation7 + $0x18] sm:$0xff] %v211
    %228 = vst [vmem:[#allocation7 + $0x20] sm:$0xff] %v212
    %229 = vst [vmem:[#allocation7 + $0x28] sm:$0xff] %v213
    %230 = vst [vmem:[#allocation7 + $0x30] sm:$0xff] %v214
    %231 = vst [vmem:[#allocation7 + $0x38] sm:$0xff] %v215
    %232 = vst [vmem:[#allocation7 + $0x40] sm:$0xff] %v216
    %233 = vst [vmem:[#allocation7 + $0x48] sm:$0xff] %v217
    %234 = vst [vmem:[#allocation7 + $0x50] sm:$0xff] %v218
    %235 = vst [vmem:[#allocation7 + $0x58] sm:$0xff] %v219
    %236 = vst [vmem:[#allocation7 + $0x60] sm:$0xff] %v220
    %237 = vst [vmem:[#allocation7 + $0x68] sm:$0xff] %v221
    %238 = vst [vmem:[#allocation7 + $0x70] sm:$0xff] %v222
    %239 = vst [vmem:[#allocation7 + $0x78] sm:$0xff] %v223
    // Predicated region
    $region18: #{tpu_custom_call.1} parent=1 // pred_check
      _
    $region19: #{tpu_custom_call.1} parent=1 // pred_check_branch
      %241 = sbr.rel (0) target = $region21
    $region20: #{tpu_custom_call.1} parent=1 // pred_region
      %s243 = ssub.s32 2048, 2048
      %244 = vsyncadd [#allocation4], %s243
      %s245 = sshll.u32 [#allocation7], 4
      %s246 = int_to_ptr.vmem [resolvable:$true] %s245
      %251 = dma.vmem_to_hbm [thread:$0]  %s246, 2048, %s2, [#allocation4], 256, 256, 16
    $region21: #{tpu_custom_call.1} parent=1 // pred_fallthru
      _
    // Predicated region
    $region22: #{tpu_custom_call.1} parent=1 // pred_check
      _
    $region23: #{tpu_custom_call.1} parent=1 // pred_check_branch
      %253 = sbr.rel (0) target = $region25
    $region24: #{tpu_custom_call.1} parent=1 // pred_region
      %254 = dma.done [#allocation4], 2048
    $region25: #{tpu_custom_call.1} parent=1 // pred_fallthru
      _
    %255 = vsyncpa [#allocation3], 1
    %256 = vsyncpa [#allocation6], 1
    %257 = vsyncpa [#allocation4], 1

</llo_original>
